<compile_context>
chip_gen: v6e
topology: v6e:2x2x1
jax: 0.10.0
libtpu: 0.0.40
codegen_flags: <defaults>
</compile_context>

<pallas_src>
import jax
import jax.numpy as jnp
from jax import lax
from jax.experimental import pallas as pl
from jax.experimental.pallas import tpu as pltpu


# ---------------------------------------------------------------------------
# Helpers
# ---------------------------------------------------------------------------
def _vmem_capacity_bytes():
    try:
        info = pltpu.get_tpu_info()
        cap = getattr(info, "vmem_capacity_bytes", None)
        if cap:
            return int(cap)
    except Exception:
        pass
    return 64 << 20  # conservative fallback (v7x per-core VMEM)


def _pick_hw_tile(hw, c, preferred, budget):
    """Largest lane tile dividing hw whose double-buffered f32 in+out tiles
    stay within ~half the VMEM budget (hw is already a multiple of 128)."""
    for t in (preferred, 2048, 1024, 512, 256, 128):
        if not t or t > hw or hw % t:
            continue
        if t == 128 or 4 * c * t * 4 <= budget // 2:
            return t
    return hw  # unreachable after padding; defensive


# ---------------------------------------------------------------------------
# Fused kernel: Gram accumulation over HW tiles, softmax + apply + residual
# on the last tile.  grid = (B, HW//t); j is the reduction axis ("arbitrary").
# ---------------------------------------------------------------------------
def _cam_fused_kernel(beta_ref, x_ref, o_ref, x_save, gram_acc):
    j = pl.program_id(1)
    t = x_ref.shape[-1]

    @pl.when(j == 0)
    def _():
        gram_acc[...] = jnp.zeros_like(gram_acc)

    xb = x_ref[0].astype(jnp.bfloat16)                         # (C, t)
    off = pl.multiple_of(j * t, t)
    x_save[:, pl.ds(off, t)] = xb                              # keep x on-chip
    # G += x_tile @ x_tile^T (contract over the HW/lane axis), f32 accumulate.
    gram_acc[...] += lax.dot_general(
        xb, xb, (((1,), (1,)), ((), ())),
        preferred_element_type=jnp.float32)

    @pl.when(j == pl.num_programs(1) - 1)
    def _():
        g = gram_acc[...]                                      # (C, C) f32
        # softmax(rowmax(G) - G) == softmax(-G); stabilize with a single
        # reduce: p = exp(rowmin(G) - G).
        p = jnp.exp(jnp.min(g, axis=-1, keepdims=True) - g)
        inv = pl.reciprocal(jnp.sum(p, axis=-1, keepdims=True), approx=True)
        attn = (p * inv).astype(jnp.bfloat16)                  # (C, C)
        xs = x_save[...]                                       # (C, HWp) bf16
        feat = jnp.dot(attn, xs, preferred_element_type=jnp.float32)
        o_ref[0] = beta_ref[0] * feat + xs.astype(jnp.float32)


# ---------------------------------------------------------------------------
# Fallback kernel 1 (2-pass path): Gram accumulation + CAM softmax.
# ---------------------------------------------------------------------------
def _cam_attn_kernel(x_ref, attn_ref, gram_acc):
    j = pl.program_id(1)

    @pl.when(j == 0)
    def _():
        gram_acc[...] = jnp.zeros_like(gram_acc)

    xb = x_ref[0].astype(jnp.bfloat16)                         # (C, t)
    gram_acc[...] += lax.dot_general(
        xb, xb, (((1,), (1,)), ((), ())),
        preferred_element_type=jnp.float32)

    @pl.when(j == pl.num_programs(1) - 1)
    def _():
        g = gram_acc[...]
        p = jnp.exp(jnp.min(g, axis=-1, keepdims=True) - g)
        inv = pl.reciprocal(jnp.sum(p, axis=-1, keepdims=True), approx=True)
        attn_ref[0] = (p * inv).astype(attn_ref.dtype)


# ---------------------------------------------------------------------------
# Fallback kernel 2 (2-pass path): out = beta * (A @ x_tile) + x_tile.
# ---------------------------------------------------------------------------
def _cam_apply_kernel(beta_ref, attn_ref, x_ref, o_ref):
    x = x_ref[0]                                               # (C, t)
    feat = jnp.dot(attn_ref[0], x.astype(jnp.bfloat16),
                   preferred_element_type=jnp.float32)         # (C, t) f32
    o_ref[0] = beta_ref[0] * feat + x.astype(jnp.float32)


# ---------------------------------------------------------------------------
# Wrapper
# ---------------------------------------------------------------------------
def channel_attention(x_nchw, beta, *, hw_tile=None, force_two_pass=False):
    B, C, H, W = x_nchw.shape
    HW = H * W
    x_flat = x_nchw.reshape(B, C, HW)

    # Pad the lane (HW) axis to a multiple of 128 so every block is pipelined
    # and lane-dense.  Zero columns do not change G = x x^T, and the padded
    # output columns are sliced off below.
    HWp = max(128, ((HW + 127) // 128) * 128)
    if HWp != HW:
        x_flat = jnp.pad(x_flat, ((0, 0), (0, 0), (0, HWp - HW)))

    cap = _vmem_capacity_bytes()            # 64 MiB (v7x) / 128 MiB (v5e/v6e)
    budget = cap * 3 // 4                   # headroom for compiler scratch

    t = _pick_hw_tile(HWp, C, hw_tile, budget)
    n_hw = HWp // t
    itemsize = x_flat.dtype.itemsize
    beta_arr = jnp.asarray(beta, jnp.float32).reshape(1)

    # Fused-path per-batch working set estimate.
    fused_bytes = (2 * C * t * itemsize     # x tiles (double-buffered)
                   + 2 * C * HWp * 4        # resident f32 output block
                   + C * HWp * 2            # bf16 resident copy of x
                   + C * C * 4              # f32 Gram accumulator
                   + C * HWp * 4)           # f32 matmul-result temporary

    if fused_bytes <= budget and not force_two_pass:
        out = pl.pallas_call(
            _cam_fused_kernel,
            out_shape=jax.ShapeDtypeStruct((B, C, HWp), jnp.float32),
            grid=(B, n_hw),
            in_specs=[
                pl.BlockSpec(memory_space=pltpu.MemorySpace.SMEM),  # beta
                pl.BlockSpec((1, C, t), lambda b, j: (b, 0, j)),    # x tile
            ],
            out_specs=pl.BlockSpec((1, C, HWp), lambda b, j: (b, 0, 0)),
            scratch_shapes=[
                pltpu.VMEM((C, HWp), jnp.bfloat16),  # resident x copy
                pltpu.VMEM((C, C), jnp.float32),     # Gram accumulator
            ],
            compiler_params=pltpu.CompilerParams(
                dimension_semantics=("parallel", "arbitrary"),
                vmem_limit_bytes=int(
                    min(max(fused_bytes + (8 << 20), 32 << 20), budget))),
        )(beta_arr, x_flat)
    else:
        # -------- 2-pass fallback (large C*HW working sets) --------
        attn_b = C * C * 2
        p1_bytes = 2 * C * t * itemsize + 2 * attn_b + C * C * 4
        attn = pl.pallas_call(
            _cam_attn_kernel,
            out_shape=jax.ShapeDtypeStruct((B, C, C), jnp.bfloat16),
            grid=(B, n_hw),
            in_specs=[pl.BlockSpec((1, C, t), lambda b, j: (b, 0, j))],
            out_specs=pl.BlockSpec((1, C, C), lambda b, j: (b, 0, 0)),
            scratch_shapes=[pltpu.VMEM((C, C), jnp.float32)],
            compiler_params=pltpu.CompilerParams(
                dimension_semantics=("parallel", "arbitrary"),
                vmem_limit_bytes=int(
                    min(max(p1_bytes + (8 << 20), 32 << 20), budget))),
        )(x_flat)

        p2_bytes = 2 * attn_b + 2 * C * t * itemsize + 2 * C * t * 4
        out = pl.pallas_call(
            _cam_apply_kernel,
            out_shape=jax.ShapeDtypeStruct((B, C, HWp), jnp.float32),
            grid=(B, n_hw),
            in_specs=[
                pl.BlockSpec(memory_space=pltpu.MemorySpace.SMEM),  # beta
                pl.BlockSpec((1, C, C), lambda b, j: (b, 0, 0)),    # attention
                pl.BlockSpec((1, C, t), lambda b, j: (b, 0, j)),    # x tile
            ],
            out_specs=pl.BlockSpec((1, C, t), lambda b, j: (b, 0, j)),
            compiler_params=pltpu.CompilerParams(
                dimension_semantics=("parallel", "parallel"),
                vmem_limit_bytes=int(
                    min(max(p2_bytes + (8 << 20), 32 << 20), budget))),
        )(beta_arr, attn, x_flat)

    if HWp != HW:
        out = out[..., :HW]
    return out.reshape(B, C, H, W)


def channel_attention_reference(x_nchw, beta):
    """Pure-JAX reference of the PyTorch module (same bf16 MXU-input casts as
    the kernels so the comparison tolerance can be tight)."""
    B, C, H, W = x_nchw.shape
    xf = x_nchw.reshape(B, C, H * W)
    xb = xf.astype(jnp.bfloat16)
    g = jnp.einsum("bcn,bdn->bcd", xb, xb, preferred_element_type=jnp.float32)
    a = jnp.max(g, axis=-1, keepdims=True) - g
    a = jax.nn.softmax(a, axis=-1).astype(jnp.bfloat16)
    feat = jnp.einsum("bcd,bdn->bcn", a, xb, preferred_element_type=jnp.float32)
    out = beta * feat + xf
    return out.reshape(B, C, H, W)


if __name__ == "__main__":
    key = jax.random.PRNGKey(0)
    B, C, H, W = 2, 64, 16, 16
    x = jax.random.normal(key, (B, C, H, W), jnp.float32)

    # TODO(synk): PyTorch initializes beta = nn.Parameter(zeros) (out == x at
    # init); use 0.5 here so the attention path actually contributes.
    beta = 0.5

    ref = channel_attention_reference(x, beta)

    # Fused path; hw_tile=128 -> 2 HW tiles/batch exercises Gram accumulation.
    out = jax.block_until_ready(channel_attention(x, beta, hw_tile=128))
    assert out.shape == (B, C, H, W), out.shape
    assert bool(jnp.all(jnp.isfinite(out)))
    err = float(jnp.max(jnp.abs(out - ref)))
    assert err < 5e-2, err

    # Also exercise the 2-pass fallback (used when the fused working set would
    # not fit the generation's VMEM budget at production C / HW).
    out2 = jax.block_until_ready(
        channel_attention(x, beta, hw_tile=128, force_two_pass=True))
    err2 = float(jnp.max(jnp.abs(out2 - ref)))
    assert err2 < 5e-2, err2

    print("KERNEL_OK")
</pallas_src>

<mosaic_0001>
module attributes {stable_mosaic.version = 11 : i64} {
  func.func @_cam_fused_kernel(%arg0: i32, %arg1: i32, %arg2: memref<1xf32, #tpu.memory_space<smem>>, %arg3: memref<1x64x128xf32, #tpu.memory_space<vmem>>, %arg4: memref<1x64x256xf32, #tpu.memory_space<vmem>>, %arg5: memref<64x256xbf16, #tpu.memory_space<vmem>>, %arg6: memref<64x64xf32, #tpu.memory_space<vmem>>) attributes {dimension_semantics = [#tpu.dimension_semantics<parallel>, #tpu.dimension_semantics<arbitrary>], iteration_bounds = array<i64: 2, 2>, scalar_prefetch = 0 : i64, scratch_operands = 2 : i64, tpu.core_type = #tpu.core_type<tc>, window_params = [{transform_indices = @transform_0, window_bounds = array<i64: 1>}, {transform_indices = @transform_1, window_bounds = array<i64: 1, 64, 128>}, {transform_indices = @transform_2, window_bounds = array<i64: 1, 64, 256>}]} {
    %c0_i32 = arith.constant 0 : i32
    %0 = arith.cmpi eq, %arg1, %c0_i32 : i32
    %1 = arith.extui %0 : i1 to i32
    %c0_i32_0 = arith.constant 0 : i32
    %2 = arith.cmpi ne, %1, %c0_i32_0 : i32
    scf.if %2 {
      %cst_9 = arith.constant 0.000000e+00 : f32
      %17 = vector.broadcast %cst_9 : f32 to vector<64x64xf32>
      %c0_10 = arith.constant 0 : index
      %c0_11 = arith.constant 0 : index
      %18 = vector.load %arg6[%c0_10, %c0_11] : memref<64x64xf32, #tpu.memory_space<vmem>>, vector<64x64xf32>
      tpu.vector_store %arg6[%c0_10, %c0_11], %17 {strides = array<i32>} : memref<64x64xf32, #tpu.memory_space<vmem>>, vector<64x64xf32>,
    } else {
    }
    %c0 = arith.constant 0 : index
    %c0_1 = arith.constant 0 : index
    %c0_2 = arith.constant 0 : index
    %3 = vector.load %arg3[%c0, %c0_1, %c0_2] : memref<1x64x128xf32, #tpu.memory_space<vmem>>, vector<1x64x128xf32>
    %4 = vector.shape_cast %3 : vector<1x64x128xf32> to vector<64x128xf32>
    %5 = arith.truncf %4 : vector<64x128xf32> to vector<64x128xbf16>
    %c128_i32 = arith.constant 128 : i32
    %6 = arith.muli %arg1, %c128_i32 : i32
    %7 = tpu.assume_multiple %6, 128 : i32
    %c0_3 = arith.constant 0 : index
    %8 = arith.index_cast %7 : i32 to index
    %9 = vector.load %arg5[%c0_3, %8] : memref<64x256xbf16, #tpu.memory_space<vmem>>, vector<64x128xbf16>
    tpu.vector_store %arg5[%c0_3, %8], %5 {strides = array<i32>} : memref<64x256xbf16, #tpu.memory_space<vmem>>, vector<64x128xbf16>,
    %c0_4 = arith.constant 0 : index
    %c0_5 = arith.constant 0 : index
    %10 = vector.load %arg6[%c0_4, %c0_5] : memref<64x64xf32, #tpu.memory_space<vmem>>, vector<64x64xf32>
    %cst = arith.constant dense<0.000000e+00> : vector<64x64xf32>
    %11 = tpu.matmul %5, %5, %cst {dimension_numbers = #tpu.dot_dimension_numbers<[1], [1], [0], [0], [0, 0, 1, 0], [], []>} : vector<64x128xbf16>, vector<64x128xbf16>, vector<64x64xf32> -> vector<64x64xf32>
    %12 = arith.addf %10, %11 : vector<64x64xf32>
    %c0_6 = arith.constant 0 : index
    %c0_7 = arith.constant 0 : index
    %13 = vector.load %arg6[%c0_6, %c0_7] : memref<64x64xf32, #tpu.memory_space<vmem>>, vector<64x64xf32>
    tpu.vector_store %arg6[%c0_6, %c0_7], %12 {strides = array<i32>} : memref<64x64xf32, #tpu.memory_space<vmem>>, vector<64x64xf32>,
    %c1_i32 = arith.constant 1 : i32
    %14 = arith.cmpi eq, %arg1, %c1_i32 : i32
    %15 = arith.extui %14 : i1 to i32
    %c0_i32_8 = arith.constant 0 : i32
    %16 = arith.cmpi ne, %15, %c0_i32_8 : i32
    scf.if %16 {
      %c0_9 = arith.constant 0 : index
      %c0_10 = arith.constant 0 : index
      %17 = vector.load %arg6[%c0_9, %c0_10] : memref<64x64xf32, #tpu.memory_space<vmem>>, vector<64x64xf32>
      %cst_11 = arith.constant dense<0x7F800000> : vector<64xf32>
      %18 = vector.multi_reduction <minimumf>, %17, %cst_11 [1] : vector<64x64xf32> to vector<64xf32>
      %19 = vector.shape_cast %18 : vector<64xf32> to vector<64x1xf32>
      %20 = vector.broadcast %19 : vector<64x1xf32> to vector<64x64xf32>
      %21 = arith.subf %20, %17 : vector<64x64xf32>
      %22 = math.exp %21 : vector<64x64xf32>
      %cst_12 = arith.constant dense<0.000000e+00> : vector<64xf32>
      %23 = vector.multi_reduction <add>, %22, %cst_12 [1] : vector<64x64xf32> to vector<64xf32>
      %24 = vector.shape_cast %23 : vector<64xf32> to vector<64x1xf32>
      %25 = tpu.reciprocal %24 {approx = true} : vector<64x1xf32> -> vector<64x1xf32>
      %26 = vector.broadcast %25 : vector<64x1xf32> to vector<64x64xf32>
      %27 = arith.mulf %22, %26 : vector<64x64xf32>
      %28 = arith.truncf %27 : vector<64x64xf32> to vector<64x64xbf16>
      %c0_13 = arith.constant 0 : index
      %c0_14 = arith.constant 0 : index
      %29 = vector.load %arg5[%c0_13, %c0_14] : memref<64x256xbf16, #tpu.memory_space<vmem>>, vector<64x256xbf16>
      %cst_15 = arith.constant dense<0.000000e+00> : vector<64x256xf32>
      %30 = tpu.matmul %28, %29, %cst_15 {dimension_numbers = #tpu.dot_dimension_numbers<[1], [0], [0], [1], [0, 0, 1, 1], [], []>} : vector<64x64xbf16>, vector<64x256xbf16>, vector<64x256xf32> -> vector<64x256xf32>
      %c0_16 = arith.constant 0 : index
      %31 = memref.load %arg2[%c0_16] : memref<1xf32, #tpu.memory_space<smem>>
      %32 = vector.broadcast %31 : f32 to vector<64x256xf32>
      %33 = arith.mulf %32, %30 : vector<64x256xf32>
      %34 = arith.extf %29 : vector<64x256xbf16> to vector<64x256xf32>
      %35 = arith.addf %33, %34 : vector<64x256xf32>
      %c0_17 = arith.constant 0 : index
      %c0_18 = arith.constant 0 : index
      %c0_19 = arith.constant 0 : index
      %36 = vector.load %arg4[%c0_17, %c0_18, %c0_19] : memref<1x64x256xf32, #tpu.memory_space<vmem>>, vector<1x64x256xf32>
      %37 = vector.shape_cast %36 : vector<1x64x256xf32> to vector<64x256xf32>
      %38 = vector.shape_cast %35 : vector<64x256xf32> to vector<1x64x256xf32>
      tpu.vector_store %arg4[%c0_17, %c0_18, %c0_19], %38 {strides = array<i32>} : memref<1x64x256xf32, #tpu.memory_space<vmem>>, vector<1x64x256xf32>,
    } else {
    }
    return
  }
  func.func @transform_0(%arg0: i32, %arg1: i32) -> i32 {
    %c0_i32 = arith.constant 0 : i32
    %c0_i32_0 = arith.constant 0 : i32
    return %c0_i32 : i32
  }
  func.func @transform_1(%arg0: i32, %arg1: i32) -> (i32, i32, i32) {
    %c0_i32 = arith.constant 0 : i32
    %c0_i32_0 = arith.constant 0 : i32
    return %arg0, %c0_i32, %arg1 : i32, i32, i32
  }
  func.func @transform_2(%arg0: i32, %arg1: i32) -> (i32, i32, i32) {
    %c0_i32 = arith.constant 0 : i32
    %c0_i32_0 = arith.constant 0 : i32
    %c0_i32_1 = arith.constant 0 : i32
    return %arg0, %c0_i32, %c0_i32_0 : i32, i32, i32
  }
}

</mosaic_0001>

<llo_original>
// kernel: tpu_custom_call.1
$region0: #{tpu_custom_call.1}
  #allocation0 [shape = 'u32[]', space=smem, size = 0x4, offset = 0x4, fixed_abs, tag = 'smem constant byte address 0x4 - core index']
  #allocation1 [shape = 'u32[144,128]{1,0:T(1,128)}', space=vmem, size = 0x12000, scoped, tag = 'internal scratch']
  #allocation2 [shape = 'bf16[64,256]{1,0:T(8,128)(2,1)}', space=vmem, size = 0x8000, scoped, tag = 'scratch operand']
  #allocation3 [shape = 'f32[64,64]{1,0:T(8,128)}', space=vmem, size = 0x8000, scoped, tag = 'scratch operand']
  #allocation4 [shape = 'f32[1]{0:T(128)S(6)}', space=smem, size = 0x200, scoped, tag = 'scoped memory for tpu_custom_call.1']
  %s0 = inlined_call_operand.<no memory space> [shape: f32[1], index: 0, kind: input, shape index: {}]
  %s1 = inlined_call_operand.hbm [shape: f32[2,64,256], index: 1, kind: input, shape index: {}]
  %s2 = inlined_call_operand.hbm [shape: f32[2,64,256], index: 2, kind: output, shape index: {}]
  %s3 = sld [smem:[#allocation0]]
  $region53: #{tpu_custom_call.1} parent=0
    _
  %s5 = ssub.s32 1, %s3
  %s6 = scalar_select 0, %s5, %s3
  %7 = sst [smem:[#allocation4]] %s0
  $region1: #{tpu_custom_call.1} parent=0
    #allocation5 [shape = 'u8[65536]{0}', space=vmem, size = 0x10000, scoped, tag = 'input window, operand 1']
    #allocation6 [shape = 's32[2]{0}', space=sflag, size = 0x8, scoped, tag = 'scoped memory for tpu_custom_call.1']
    #allocation7 [shape = 's32[2]{0}', space=sflag, size = 0x8, scoped, tag = 'scoped memory for tpu_custom_call.1']
    #allocation8 [shape = 'u8[131072]{0}', space=vmem, size = 0x20000, scoped, tag = 'output window, operand 0']
    %8 = vsyncpa [#allocation6], 0
    %s9 = scalar_lea.sflag [#allocation6], 1
    %10 = vsyncpa %s9, 0
    %11 = vsyncpa [#allocation7], 0
    %s12 = scalar_lea.sflag [#allocation7], 1
    %13 = vsyncpa %s12, 0
    loop: start=0, step=1, limit=6
    $region2: #{tpu_custom_call.1} parent=1 // loop_pre_header
      _
    $region3: #{tpu_custom_call.1} parent=1 // loop_header
      %s15 = sphi 0, %s19
      %p16 = scmp.ge.s32.totalorder %s15, 6
      %s22 = sphi 0, %s34
      %s23 = sphi 0, %s30
      %s24 = sphi 0, %s22
      %s25 = sphi 0, %s23
      %s26 = sphi 0, %s24
      %s27 = sphi 0, %s25
      %s35 = sphi 0, %s35
      %s37 = sphi 0, %s35
      %s38 = sphi 0, %s37
      %s52 = sphi 0, %s38
      %s60 = sphi 0, %s62
      %s63 = sphi 0, %s60
      %s64 = sphi 0, %s63
      %s80 = sphi 0, %s64
      %s86 = sphi 0, %s88
      %s89 = sphi 0, %s86
      %s90 = sphi 0, %s89
      %s106 = sphi 0, %s90
    $region4: #{tpu_custom_call.1} parent=1 // loop_header_branch
      %18 = sbr.rel (%p16) target = $region8
    $region5: #{tpu_custom_call.1} parent=1 // loop_body
      %s20 = ssub.s32 %s15, 1
      %s21 = ssub.s32 %s15, 2
      %s28 = sadd.s32 1, %s23
      %p29 = scmp.ge.s32.totalorder %s28, 2
      %s30 = scalar_select %p29, 0, %s28
      %s31 = sadd.s32 1, %s22
      %s32 = scalar_select %p29, %s31, %s22
      %p33 = scmp.ge.s32.totalorder %s32, 2
      %s34 = scalar_select %p33, 0, %s32
      %s36 = sadd.s32 %s35, 1
      %p39 = scmp.eq.s32.totalorder %s15, 3
      %p40 = scmp.ne.s32.totalorder %s35, %s37
      %p41 = scmp.eq.s32.totalorder %s15, 0
      %p42 = por %p40, %p41
      %p43 = scmp.ne.s32.totalorder %s35, %s37
      %p44 = scmp.eq.s32.totalorder %s20, 3
      %p45 = por %p43, %p44
      %p46 = scmp.ne.s32.totalorder %s37, %s38
      %p47 = scmp.eq.s32.totalorder %s20, 0
      %p48 = por %p46, %p47
      %p49 = scmp.ne.s32.totalorder %s37, %s38
      %p50 = scmp.eq.s32.totalorder %s21, 3
      %p51 = por %p49, %p50
      %p53 = scmp.ne.s32.totalorder %s38, %s52
      %p54 = scmp.eq.s32.totalorder %s21, 0
      %p55 = por %p53, %p54
      %s56 = ssub.s32 %s22, %s34
      %s57 = ssub.s32 %s23, %s30
      %s58 = sor.u32 %s56, %s57
      %p59 = scmp.eq.s32.totalorder %s58, 0
      %s61 = sadd.s32 %s60, 1
      %s62 = scalar_select %p59, %s60, %s61
      %p65 = pneg %p59
      %p66 = scmp.eq.s32.totalorder %s15, 3
      %p67 = por %p65, %p66
      %p68 = scmp.ne.s32.totalorder %s60, %s63
      %p69 = scmp.eq.s32.totalorder %s15, 0
      %p70 = por %p68, %p69
      %p71 = scmp.ne.s32.totalorder %s60, %s63
      %p72 = scmp.eq.s32.totalorder %s20, 3
      %p73 = por %p71, %p72
      %p74 = scmp.ne.s32.totalorder %s63, %s64
      %p75 = scmp.eq.s32.totalorder %s20, 0
      %p76 = por %p74, %p75
      %p77 = scmp.ne.s32.totalorder %s63, %s64
      %p78 = scmp.eq.s32.totalorder %s21, 3
      %p79 = por %p77, %p78
      %p81 = scmp.ne.s32.totalorder %s64, %s80
      %p82 = scmp.eq.s32.totalorder %s21, 0
      %p83 = por %p81, %p82
      %s84 = ssub.s32 %s22, %s34
      %p85 = scmp.eq.s32.totalorder %s84, 0
      %s87 = sadd.s32 %s86, 1
      %s88 = scalar_select %p85, %s86, %s87
      %p91 = pneg %p85
      %p92 = scmp.eq.s32.totalorder %s15, 3
      %p93 = por %p91, %p92
      %p94 = scmp.ne.s32.totalorder %s86, %s89
      %p95 = scmp.eq.s32.totalorder %s15, 0
      %p96 = por %p94, %p95
      %p97 = scmp.ne.s32.totalorder %s86, %s89
      %p98 = scmp.eq.s32.totalorder %s20, 3
      %p99 = por %p97, %p98
      %p100 = scmp.ne.s32.totalorder %s89, %s90
      %p101 = scmp.eq.s32.totalorder %s20, 0
      %p102 = por %p100, %p101
      %p103 = scmp.ne.s32.totalorder %s89, %s90
      %p104 = scmp.eq.s32.totalorder %s21, 3
      %p105 = por %p103, %p104
      %p107 = scmp.ne.s32.totalorder %s90, %s106
      %p108 = scmp.eq.s32.totalorder %s21, 0
      %p109 = por %p107, %p108
      %p110 = scmp.le.s32.totalorder 1, %s15
      %p111 = scmp.lt.s32.totalorder %s15, 5
      %p112 = pnand %p110, %p111
      %p113 = pneg %p112
      // Predicated region
      $region9: #{tpu_custom_call.1} parent=5 // pred_check
        _
      $region10: #{tpu_custom_call.1} parent=5 // pred_check_branch
        %115 = sbr.rel (%p112) target = $region12
      $region11: #{tpu_custom_call.1} parent=5 // pred_region
        %s116 = ssub.s32 %s15, 1
        // Predicated region
        $region13: #{tpu_custom_call.1} parent=11 // pred_check
          %p117 = pneg %p48
        $region14: #{tpu_custom_call.1} parent=11 // pred_check_branch
          %119 = sbr.rel (%p117) target = $region16
        $region15: #{tpu_custom_call.1} parent=11 // pred_region
          _
        $region16: #{tpu_custom_call.1} parent=11 // pred_fallthru
          _
      $region12: #{tpu_custom_call.1} parent=5 // pred_fallthru
        _
      %p120 = scmp.lt.s32.totalorder %s15, 4
      // Predicated region
      $region17: #{tpu_custom_call.1} parent=5 // pred_check
        %p121 = pneg %p120
      $region18: #{tpu_custom_call.1} parent=5 // pred_check_branch
        %123 = sbr.rel (%p121) target = $region20
      $region19: #{tpu_custom_call.1} parent=5 // pred_region
        // Predicated region
        $region21: #{tpu_custom_call.1} parent=19 // pred_check
          %p124 = pneg %p70
        $region22: #{tpu_custom_call.1} parent=19 // pred_check_branch
          %126 = sbr.rel (%p124) target = $region24
        $region23: #{tpu_custom_call.1} parent=19 // pred_region
          %s127 = sand.u32 %s60, 1
          %s128 = scalar_lea.sflag [#allocation6], %s127
          %s129 = sand.u32 %s60, 1
          %s130 = smul.addr %s129, 64
          %s131 = scalar_lea.vmem [#allocation5], %s130
          %s133 = ssub.s32 1024, 1024
          %134 = vsyncadd %s128, %s133
          %s135 = smul.addr %s22, 16
          %s136 = sadd.s32 %s23, %s135
          %s137 = smul.addr %s136, 128
          %s138 = scalar_lea.hbm %s1, %s137
          %s139 = sshll.u32 %s131, 4
          %s140 = int_to_ptr.vmem [resolvable:$true] %s139
          %145 = dma.hbm_to_vmem [thread:$0]  %s138, 1024, %s140, %s128, 256, 128, 8
        $region24: #{tpu_custom_call.1} parent=19 // pred_fallthru
          _
      $region20: #{tpu_custom_call.1} parent=5 // pred_fallthru
        _
      %p146 = scmp.le.s32.totalorder 1, %s15
      %p147 = scmp.lt.s32.totalorder %s15, 5
      %p148 = pnand %p146, %p147
      %p149 = pneg %p148
      // Predicated region
      $region25: #{tpu_custom_call.1} parent=5 // pred_check
        _
      $region26: #{tpu_custom_call.1} parent=5 // pred_check_branch
        %151 = sbr.rel (%p148) target = $region28
      $region27: #{tpu_custom_call.1} parent=5 // pred_region
        %s152 = ssub.s32 %s15, 1
        %s153 = sand.u32 %s63, 1
        %s154 = scalar_lea.sflag [#allocation6], %s153
        %s155 = sand.u32 %s63, 1
        %s156 = smul.addr %s155, 64
        %s157 = scalar_lea.vmem [#allocation5], %s156
        // Predicated region
        $region29: #{tpu_custom_call.1} parent=27 // pred_check
          %p158 = pneg %p76
        $region30: #{tpu_custom_call.1} parent=27 // pred_check_branch
          %160 = sbr.rel (%p158) target = $region32
        $region31: #{tpu_custom_call.1} parent=27 // pred_region
          %161 = dma.done %s154, 1024
        $region32: #{tpu_custom_call.1} parent=27 // pred_fallthru
          _
        %p162 = pneg %p48
        %p163 = pneg %p45
        %s164 = sand.u32 %s63, 1
        %s165 = scalar_lea.sflag [#allocation6], %s164
        %s166 = sand.u32 %s63, 1
        %s167 = smul.addr %s166, 64
        %s168 = scalar_lea.vmem [#allocation5], %s167
        %p169 = pneg %p76
        %p170 = pneg %p73
        %p171 = pneg %p102
        %p172 = pneg %p99
        %s173 = sand.u32 %s89, 1
        %s174 = scalar_lea.sflag [#allocation7], %s173
        %s175 = sand.u32 %s89, 1
        %s176 = smul.addr %s175, 128
        %s177 = scalar_lea.vmem [#allocation8], %s176
        %p179 = scmp.eq.s32.totalorder %s25, 0
        // Predicated region
        $region33: #{tpu_custom_call.1} parent=27 // pred_check
          %p180 = pneg %p179
        $region34: #{tpu_custom_call.1} parent=27 // pred_check_branch
          %182 = sbr.rel (%p180) target = $region36
        $region35: #{tpu_custom_call.1} parent=27 // pred_region
          %vm183 = vcmask 523264
          %184 = vst.msk [vmem:[#allocation3] sm:$0xff] %vm183, 0.0
          %185 = vst.msk [vmem:[#allocation3 + $0x8] sm:$0xff] %vm183, 0.0
          %186 = vst.msk [vmem:[#allocation3 + $0x10] sm:$0xff] %vm183, 0.0
          %187 = vst.msk [vmem:[#allocation3 + $0x18] sm:$0xff] %vm183, 0.0
          %188 = vst.msk [vmem:[#allocation3 + $0x20] sm:$0xff] %vm183, 0.0
          %189 = vst.msk [vmem:[#allocation3 + $0x28] sm:$0xff] %vm183, 0.0
          %190 = vst.msk [vmem:[#allocation3 + $0x30] sm:$0xff] %vm183, 0.0
          %191 = vst.msk [vmem:[#allocation3 + $0x38] sm:$0xff] %vm183, 0.0
        $region36: #{tpu_custom_call.1} parent=27 // pred_fallthru
          _
        %v192 = vld [vmem:[%s157] sm:$0xff]
        %v193 = vld [vmem:[%s157 + $0x8] sm:$0xff]
        %v194 = vld [vmem:[%s157 + $0x10] sm:$0xff]
        %v195 = vld [vmem:[%s157 + $0x18] sm:$0xff]
        %v196 = vld [vmem:[%s157 + $0x20] sm:$0xff]
        %v197 = vld [vmem:[%s157 + $0x28] sm:$0xff]
        %v198 = vld [vmem:[%s157 + $0x30] sm:$0xff]
        %v199 = vld [vmem:[%s157 + $0x38] sm:$0xff]
        %v200 = vpack.c.bf16 %v193, %v192
        %v201 = vpack.c.bf16 %v195, %v194
        %v202 = vpack.c.bf16 %v197, %v196
        %v203 = vpack.c.bf16 %v199, %v198
        %s204 = smul.u32 %s25, 128
        %v209 = vunpack.c.l.b16 %v200
        %v210 = vunpack.c.h.b16 %v200
        %v211 = vunpack.c.l.b16 %v201
        %v212 = vunpack.c.h.b16 %v201
        %v213 = vunpack.c.l.b16 %v202
        %v214 = vunpack.c.h.b16 %v202
        %v215 = vunpack.c.l.b16 %v203
        %v216 = vunpack.c.h.b16 %v203
        %v217 = vpack.c.b16 %v209, %v209
        %v218 = vpack.c.b16 %v210, %v210
        %v219 = vpack.c.b16 %v211, %v211
        %v220 = vpack.c.b16 %v212, %v212
        %v221 = vpack.c.b16 %v213, %v213
        %v222 = vpack.c.b16 %v214, %v214
        %v223 = vpack.c.b16 %v215, %v215
        %v224 = vpack.c.b16 %v216, %v216
        %s233 = sshra.s32 %s204, 7
        %s234 = sand.u32 %s204, 127
        %s235 = smul.addr %s233, 4
        %s236 = scalar_lea.vmem [#allocation2], %s235
        %237 = vst [vmem:[%s236] sm:$0xf] %v217
        %238 = vst [vmem:[%s236 + $0x8] sm:$0xf] %v218
        %239 = vst [vmem:[%s236 + $0x10] sm:$0xf] %v219
        %240 = vst [vmem:[%s236 + $0x18] sm:$0xf] %v220
        %241 = vst [vmem:[%s236 + $0x20] sm:$0xf] %v221
        %242 = vst [vmem:[%s236 + $0x28] sm:$0xf] %v222
        %243 = vst [vmem:[%s236 + $0x30] sm:$0xf] %v223
        %244 = vst [vmem:[%s236 + $0x38] sm:$0xf] %v224
        %v245 = vld [vmem:[#allocation3] sm:$0xff]
        %v246 = vld [vmem:[#allocation3 + $0x8] sm:$0xff]
        %v247 = vld [vmem:[#allocation3 + $0x10] sm:$0xff]
        %v248 = vld [vmem:[#allocation3 + $0x18] sm:$0xff]
        %v249 = vld [vmem:[#allocation3 + $0x20] sm:$0xff]
        %v250 = vld [vmem:[#allocation3 + $0x28] sm:$0xff]
        %v251 = vld [vmem:[#allocation3 + $0x30] sm:$0xff]
        %v252 = vld [vmem:[#allocation3 + $0x38] sm:$0xff]
        %253 = vmatprep.subr.bf16.mxu0 0
        %254 = vmatpush1.bf16.xpose.msra.mxu0 0
        %255 = vmatprep.subr.bf16.mxu0 0
        %256 = vmatpush1.bf16.xpose.msra.mxu0 0
        %257 = vmatprep.subr.bf16.mxu0 0
        %258 = vmatpush1.bf16.xpose.msra.mxu0 0
        %259 = vmatprep.subr.bf16.mxu0 0
        %260 = vmatpush1.bf16.xpose.msra.mxu0 0
        %261 = vmatprep.subr.bf16.mxu0 0
        %262 = vmatpush1.bf16.xpose.msra.mxu0 %v203
        %263 = vmatprep.subr.bf16.mxu0 0
        %264 = vmatpush1.bf16.xpose.msra.mxu0 %v202
        %265 = vmatprep.subr.bf16.mxu0 0
        %266 = vmatpush1.bf16.xpose.msra.mxu0 %v201
        %267 = vmatprep.subr.bf16.mxu0 0
        %268 = vmatpush1.bf16.xpose.msra.mxu0 %v200
        %269 = vmatprep.subr.bf16.mxu0 0
        %270 = vmatpush2.bf16.xpose.msra.mxu0 0
        %271 = vmatprep.subr.bf16.mxu0 0
        %272 = vmatpush2.bf16.xpose.msra.mxu0 0
        %273 = vmatprep.subr.bf16.mxu0 0
        %274 = vmatpush2.bf16.xpose.msra.mxu0 0
        %275 = vmatprep.subr.bf16.mxu0 0
        %276 = vmatpush2.bf16.xpose.msra.mxu0 0
        %277 = vmatprep.subr.bf16.mxu0 0
        %278 = vmatpush2.bf16.xpose.msra.mxu0 0
        %279 = vmatprep.subr.bf16.mxu0 0
        %280 = vmatpush2.bf16.xpose.msra.mxu0 0
        %281 = vmatprep.subr.bf16.mxu0 0
        %282 = vmatpush2.bf16.xpose.msra.mxu0 0
        %283 = vmatprep.subr.bf16.mxu0 0
        %284 = vmatpush2.bf16.xpose.msra.mxu0 0
        %285 = vmatprep.mubr.bf16.mxu0 0
        %286 = vmatmul.mubr.bf16.gmra.mxu0 %v200
        %v287 = vpop.f32.mrf.mxu0
        %v288 = vadd.f32 0.0, %v287
        %v289 = vpop.f32.mrf.mxu0
        %v290 = vpop.f32.mrf.mxu0
        %v291 = vadd.f32 0.0, %v290
        %v292 = vpop.f32.mrf.mxu0
        %293 = vmatprep.mubr.bf16.mxu0 0
        %294 = vmatmul.mubr.bf16.gmra.mxu0 %v201
        %v295 = vpop.f32.mrf.mxu0
        %v296 = vadd.f32 0.0, %v295
        %v297 = vpop.f32.mrf.mxu0
        %v298 = vpop.f32.mrf.mxu0
        %v299 = vadd.f32 0.0, %v298
        %v300 = vpop.f32.mrf.mxu0
        %301 = vmatprep.mubr.bf16.mxu0 0
        %302 = vmatmul.mubr.bf16.gmra.mxu0 %v202
        %v303 = vpop.f32.mrf.mxu0
        %v304 = vadd.f32 0.0, %v303
        %v305 = vpop.f32.mrf.mxu0
        %v306 = vpop.f32.mrf.mxu0
        %v307 = vadd.f32 0.0, %v306
        %v308 = vpop.f32.mrf.mxu0
        %309 = vmatprep.mubr.bf16.mxu0 0
        %310 = vmatmul.mubr.bf16.gmra.mxu0 %v203
        %v311 = vpop.f32.mrf.mxu0
        %v312 = vadd.f32 0.0, %v311
        %v313 = vpop.f32.mrf.mxu0
        %v314 = vpop.f32.mrf.mxu0
        %v315 = vadd.f32 0.0, %v314
        %v316 = vpop.f32.mrf.mxu0
        %317 = vdwg.mxu0
        %v318 = vadd.f32 %v245, %v288
        %v319 = vadd.f32 %v246, %v291
        %v320 = vadd.f32 %v247, %v296
        %v321 = vadd.f32 %v248, %v299
        %v322 = vadd.f32 %v249, %v304
        %v323 = vadd.f32 %v250, %v307
        %v324 = vadd.f32 %v251, %v312
        %v325 = vadd.f32 %v252, %v315
        %vm326 = vcmask 523264
        %327 = vst.msk [vmem:[#allocation3] sm:$0xff] %vm326, %v318
        %328 = vst.msk [vmem:[#allocation3 + $0x8] sm:$0xff] %vm326, %v319
        %329 = vst.msk [vmem:[#allocation3 + $0x10] sm:$0xff] %vm326, %v320
        %330 = vst.msk [vmem:[#allocation3 + $0x18] sm:$0xff] %vm326, %v321
        %331 = vst.msk [vmem:[#allocation3 + $0x20] sm:$0xff] %vm326, %v322
        %332 = vst.msk [vmem:[#allocation3 + $0x28] sm:$0xff] %vm326, %v323
        %333 = vst.msk [vmem:[#allocation3 + $0x30] sm:$0xff] %vm326, %v324
        %334 = vst.msk [vmem:[#allocation3 + $0x38] sm:$0xff] %vm326, %v325
        %p335 = scmp.eq.s32.totalorder %s25, 1
        // Predicated region
        $region37: #{tpu_custom_call.1} parent=27 // pred_check
          %p336 = pneg %p335
        $region38: #{tpu_custom_call.1} parent=27 // pred_check_branch
          %338 = sbr.rel (%p336) target = $region40
        $region39: #{tpu_custom_call.1} parent=27 // pred_region
          %v339 = vld [vmem:[#allocation3] sm:$0xff]
          %v340 = vld [vmem:[#allocation3 + $0x8] sm:$0xff]
          %v341 = vld [vmem:[#allocation3 + $0x10] sm:$0xff]
          %v342 = vld [vmem:[#allocation3 + $0x18] sm:$0xff]
          %v343 = vld [vmem:[#allocation3 + $0x20] sm:$0xff]
          %v344 = vld [vmem:[#allocation3 + $0x28] sm:$0xff]
          %v345 = vld [vmem:[#allocation3 + $0x30] sm:$0xff]
          %v346 = vld [vmem:[#allocation3 + $0x38] sm:$0xff]
          %v347 = vsel %vm326, %v339, inf
          %348 = vmin.xlane.f32.xlu0 %v347
          %v349 = vpop.xlane.xlu0 %348
          %v350 = vsel %vm326, %v340, inf
          %351 = vmin.xlane.f32.xlu0 %v350
          %v352 = vpop.xlane.xlu0 %351
          %v353 = vsel %vm326, %v341, inf
          %354 = vmin.xlane.f32.xlu0 %v353
          %v355 = vpop.xlane.xlu0 %354
          %v356 = vsel %vm326, %v342, inf
          %357 = vmin.xlane.f32.xlu0 %v356
          %v358 = vpop.xlane.xlu0 %357
          %v359 = vsel %vm326, %v343, inf
          %360 = vmin.xlane.f32.xlu0 %v359
          %v361 = vpop.xlane.xlu0 %360
          %v362 = vsel %vm326, %v344, inf
          %363 = vmin.xlane.f32.xlu0 %v362
          %v364 = vpop.xlane.xlu0 %363
          %v365 = vsel %vm326, %v345, inf
          %366 = vmin.xlane.f32.xlu0 %v365
          %v367 = vpop.xlane.xlu0 %366
          %v368 = vsel %vm326, %v346, inf
          %369 = vmin.xlane.f32.xlu0 %v368
          %v370 = vpop.xlane.xlu0 %369
          %v371 = vsub.f32 %v349, %v339
          %v372 = vsub.f32 %v352, %v340
          %v373 = vsub.f32 %v355, %v341
          %v374 = vsub.f32 %v358, %v342
          %v375 = vsub.f32 %v361, %v343
          %v376 = vsub.f32 %v364, %v344
          %v377 = vsub.f32 %v367, %v345
          %v378 = vsub.f32 %v370, %v346
          %v379 = vmul.f32 %v371, 1.442695
          %v380 = vpow.pop %v379
          %v381 = vmul.f32 %v372, 1.442695
          %v382 = vpow.pop %v381
          %v383 = vmul.f32 %v373, 1.442695
          %v384 = vpow.pop %v383
          %v385 = vmul.f32 %v374, 1.442695
          %v386 = vpow.pop %v385
          %v387 = vmul.f32 %v375, 1.442695
          %v388 = vpow.pop %v387
          %v389 = vmul.f32 %v376, 1.442695
          %v390 = vpow.pop %v389
          %v391 = vmul.f32 %v377, 1.442695
          %v392 = vpow.pop %v391
          %v393 = vmul.f32 %v378, 1.442695
          %v394 = vpow.pop %v393
          %v395 = vsel %vm326, %v380, 0.0
          %396 = vadd.xlane.f32.xlu0 %v395
          %v397 = vpop.xlane.xlu0 %396
          %v398 = vsel %vm326, %v382, 0.0
          %399 = vadd.xlane.f32.xlu0 %v398
          %v400 = vpop.xlane.xlu0 %399
          %v401 = vsel %vm326, %v384, 0.0
          %402 = vadd.xlane.f32.xlu0 %v401
          %v403 = vpop.xlane.xlu0 %402
          %v404 = vsel %vm326, %v386, 0.0
          %405 = vadd.xlane.f32.xlu0 %v404
          %v406 = vpop.xlane.xlu0 %405
          %v407 = vsel %vm326, %v388, 0.0
          %408 = vadd.xlane.f32.xlu0 %v407
          %v409 = vpop.xlane.xlu0 %408
          %v410 = vsel %vm326, %v390, 0.0
          %411 = vadd.xlane.f32.xlu0 %v410
          %v412 = vpop.xlane.xlu0 %411
          %v413 = vsel %vm326, %v392, 0.0
          %414 = vadd.xlane.f32.xlu0 %v413
          %v415 = vpop.xlane.xlu0 %414
          %v416 = vsel %vm326, %v394, 0.0
          %417 = vadd.xlane.f32.xlu0 %v416
          %v418 = vpop.xlane.xlu0 %417
          %v419 = vrcp.pop %v397
          %v420 = vrcp.pop %v400
          %v421 = vrcp.pop %v403
          %v422 = vrcp.pop %v406
          %v423 = vrcp.pop %v409
          %v424 = vrcp.pop %v412
          %v425 = vrcp.pop %v415
          %v426 = vrcp.pop %v418
          %v427 = vmul.f32 %v380, %v419
          %v428 = vmul.f32 %v382, %v420
          %v429 = vmul.f32 %v384, %v421
          %v430 = vmul.f32 %v386, %v422
          %v431 = vmul.f32 %v388, %v423
          %v432 = vmul.f32 %v390, %v424
          %v433 = vmul.f32 %v392, %v425
          %v434 = vmul.f32 %v394, %v426
          %v435 = vpack.c.bf16 %v428, %v427
          %v436 = vpack.c.bf16 %v430, %v429
          %v437 = vpack.c.bf16 %v432, %v431
          %v438 = vpack.c.bf16 %v434, %v433
          %v439 = vld [vmem:[#allocation2] sm:$0xff]
          %v440 = vld [vmem:[#allocation2 + $0x8] sm:$0xff]
          %v441 = vld [vmem:[#allocation2 + $0x10] sm:$0xff]
          %v442 = vld [vmem:[#allocation2 + $0x18] sm:$0xff]
          %v443 = vld [vmem:[#allocation2 + $0x20] sm:$0xff]
          %v444 = vld [vmem:[#allocation2 + $0x28] sm:$0xff]
          %v445 = vld [vmem:[#allocation2 + $0x30] sm:$0xff]
          %v446 = vld [vmem:[#allocation2 + $0x38] sm:$0xff]
          %v455 = vunpack.c.l.b16 %v439
          %v456 = vunpack.c.h.b16 %v439
          %v457 = vunpack.c.l.b16 %v440
          %v458 = vunpack.c.h.b16 %v440
          %v459 = vunpack.c.l.b16 %v441
          %v460 = vunpack.c.h.b16 %v441
          %v461 = vunpack.c.l.b16 %v442
          %v462 = vunpack.c.h.b16 %v442
          %v463 = vunpack.c.l.b16 %v443
          %v464 = vunpack.c.h.b16 %v443
          %v465 = vunpack.c.l.b16 %v444
          %v466 = vunpack.c.h.b16 %v444
          %v467 = vunpack.c.l.b16 %v445
          %v468 = vunpack.c.h.b16 %v445
          %v469 = vunpack.c.l.b16 %v446
          %v470 = vunpack.c.h.b16 %v446
          %v471 = vpack.c.b16 %v457, %v455
          %v472 = vpack.c.b16 %v458, %v456
          %v473 = vpack.c.b16 %v461, %v459
          %v474 = vpack.c.b16 %v462, %v460
          %v475 = vpack.c.b16 %v465, %v463
          %v476 = vpack.c.b16 %v466, %v464
          %v477 = vpack.c.b16 %v469, %v467
          %v478 = vpack.c.b16 %v470, %v468
          %v488 = vsel %vm326, %v435, 0
          %v491 = vsel %vm326, %v436, 0
          %v494 = vsel %vm326, %v437, 0
          %v497 = vsel %vm326, %v438, 0
          %499 = vmatprep.subr.bf16.mxu0 0
          %500 = vmatpush1.bf16.msra.mxu0 0
          %501 = vmatprep.subr.bf16.mxu0 0
          %502 = vmatpush1.bf16.msra.mxu0 0
          %503 = vmatprep.subr.bf16.mxu0 0
          %504 = vmatpush1.bf16.msra.mxu0 0
          %505 = vmatprep.subr.bf16.mxu0 0
          %506 = vmatpush1.bf16.msra.mxu0 0
          %507 = vmatprep.subr.bf16.mxu0 %v478
          %508 = vmatpush1.bf16.msra.mxu0 %v477
          %509 = vmatprep.subr.bf16.mxu0 %v476
          %510 = vmatpush1.bf16.msra.mxu0 %v475
          %511 = vmatprep.subr.bf16.mxu0 %v474
          %512 = vmatpush1.bf16.msra.mxu0 %v473
          %513 = vmatprep.subr.bf16.mxu0 %v472
          %514 = vmatpush1.bf16.msra.mxu0 %v471
          %515 = vmatprep.subr.bf16.mxu0 0
          %516 = vmatpush2.bf16.msra.mxu0 0
          %517 = vmatprep.subr.bf16.mxu0 0
          %518 = vmatpush2.bf16.msra.mxu0 0
          %519 = vmatprep.subr.bf16.mxu0 0
          %520 = vmatpush2.bf16.msra.mxu0 0
          %521 = vmatprep.subr.bf16.mxu0 0
          %522 = vmatpush2.bf16.msra.mxu0 0
          %523 = vmatprep.subr.bf16.mxu0 0
          %524 = vmatpush2.bf16.msra.mxu0 0
          %525 = vmatprep.subr.bf16.mxu0 0
          %526 = vmatpush2.bf16.msra.mxu0 0
          %527 = vmatprep.subr.bf16.mxu0 0
          %528 = vmatpush2.bf16.msra.mxu0 0
          %529 = vmatprep.subr.bf16.mxu0 0
          %530 = vmatpush2.bf16.msra.mxu0 0
          %531 = vmatprep.mubr.bf16.mxu0 0
          %532 = vmatmul.mubr.bf16.gmra.mxu0 %v488
          %v533 = vpop.f32.mrf.mxu0
          %v534 = vadd.f32 0.0, %v533
          %v535 = vpop.f32.mrf.mxu0
          %v536 = vadd.f32 0.0, %v535
          %v537 = vpop.f32.mrf.mxu0
          %v538 = vadd.f32 0.0, %v537
          %v539 = vpop.f32.mrf.mxu0
          %v540 = vadd.f32 0.0, %v539
          %541 = vmatprep.mubr.bf16.mxu0 0
          %542 = vmatmul.mubr.bf16.gmra.mxu0 %v491
          %v543 = vpop.f32.mrf.mxu0
          %v544 = vadd.f32 0.0, %v543
          %v545 = vpop.f32.mrf.mxu0
          %v546 = vadd.f32 0.0, %v545
          %v547 = vpop.f32.mrf.mxu0
          %v548 = vadd.f32 0.0, %v547
          %v549 = vpop.f32.mrf.mxu0
          %v550 = vadd.f32 0.0, %v549
          %551 = vmatprep.mubr.bf16.mxu0 0
          %552 = vmatmul.mubr.bf16.gmra.mxu0 %v494
          %v553 = vpop.f32.mrf.mxu0
          %v554 = vadd.f32 0.0, %v553
          %v555 = vpop.f32.mrf.mxu0
          %v556 = vadd.f32 0.0, %v555
          %v557 = vpop.f32.mrf.mxu0
          %v558 = vadd.f32 0.0, %v557
          %v559 = vpop.f32.mrf.mxu0
          %v560 = vadd.f32 0.0, %v559
          %561 = vmatprep.mubr.bf16.mxu0 0
          %562 = vmatmul.mubr.bf16.gmra.mxu0 %v497
          %v563 = vpop.f32.mrf.mxu0
          %v564 = vadd.f32 0.0, %v563
          %v565 = vpop.f32.mrf.mxu0
          %v566 = vadd.f32 0.0, %v565
          %v567 = vpop.f32.mrf.mxu0
          %v568 = vadd.f32 0.0, %v567
          %v569 = vpop.f32.mrf.mxu0
          %v570 = vadd.f32 0.0, %v569
          %571 = vdwg.mxu0
          %s572 = sld [smem:[#allocation4]]
          %v573 = vstv %s572
          %v574 = vmul.f32 %v573, %v534
          %v575 = vmul.f32 %v573, %v536
          %v576 = vmul.f32 %v573, %v538
          %v577 = vmul.f32 %v573, %v540
          %v578 = vmul.f32 %v573, %v544
          %v579 = vmul.f32 %v573, %v546
          %v580 = vmul.f32 %v573, %v548
          %v581 = vmul.f32 %v573, %v550
          %v582 = vmul.f32 %v573, %v554
          %v583 = vmul.f32 %v573, %v556
          %v584 = vmul.f32 %v573, %v558
          %v585 = vmul.f32 %v573, %v560
          %v586 = vmul.f32 %v573, %v564
          %v587 = vmul.f32 %v573, %v566
          %v588 = vmul.f32 %v573, %v568
          %v589 = vmul.f32 %v573, %v570
          %v590 = vunpack.c.l.bf16 %v439
          %v591 = vunpack.c.h.bf16 %v439
          %v592 = vunpack.c.l.bf16 %v440
          %v593 = vunpack.c.h.bf16 %v440
          %v594 = vunpack.c.l.bf16 %v441
          %v595 = vunpack.c.h.bf16 %v441
          %v596 = vunpack.c.l.bf16 %v442
          %v597 = vunpack.c.h.bf16 %v442
          %v598 = vunpack.c.l.bf16 %v443
          %v599 = vunpack.c.h.bf16 %v443
          %v600 = vunpack.c.l.bf16 %v444
          %v601 = vunpack.c.h.bf16 %v444
          %v602 = vunpack.c.l.bf16 %v445
          %v603 = vunpack.c.h.bf16 %v445
          %v604 = vunpack.c.l.bf16 %v446
          %v605 = vunpack.c.h.bf16 %v446
          %v606 = vadd.f32 %v574, %v590
          %v607 = vadd.f32 %v575, %v591
          %v608 = vadd.f32 %v576, %v592
          %v609 = vadd.f32 %v577, %v593
          %v610 = vadd.f32 %v578, %v594
          %v611 = vadd.f32 %v579, %v595
          %v612 = vadd.f32 %v580, %v596
          %v613 = vadd.f32 %v581, %v597
          %v614 = vadd.f32 %v582, %v598
          %v615 = vadd.f32 %v583, %v599
          %v616 = vadd.f32 %v584, %v600
          %v617 = vadd.f32 %v585, %v601
          %v618 = vadd.f32 %v586, %v602
          %v619 = vadd.f32 %v587, %v603
          %v620 = vadd.f32 %v588, %v604
          %v621 = vadd.f32 %v589, %v605
          %622 = vst [vmem:[%s177] sm:$0xff] %v606
          %623 = vst [vmem:[%s177 + $0x8] sm:$0xff] %v607
          %624 = vst [vmem:[%s177 + $0x10] sm:$0xff] %v608
          %625 = vst [vmem:[%s177 + $0x18] sm:$0xff] %v609
          %626 = vst [vmem:[%s177 + $0x20] sm:$0xff] %v610
          %627 = vst [vmem:[%s177 + $0x28] sm:$0xff] %v611
          %628 = vst [vmem:[%s177 + $0x30] sm:$0xff] %v612
          %629 = vst [vmem:[%s177 + $0x38] sm:$0xff] %v613
          %630 = vst [vmem:[%s177 + $0x40] sm:$0xff] %v614
          %631 = vst [vmem:[%s177 + $0x48] sm:$0xff] %v615
          %632 = vst [vmem:[%s177 + $0x50] sm:$0xff] %v616
          %633 = vst [vmem:[%s177 + $0x58] sm:$0xff] %v617
          %634 = vst [vmem:[%s177 + $0x60] sm:$0xff] %v618
          %635 = vst [vmem:[%s177 + $0x68] sm:$0xff] %v619
          %636 = vst [vmem:[%s177 + $0x70] sm:$0xff] %v620
          %637 = vst [vmem:[%s177 + $0x78] sm:$0xff] %v621
        $region40: #{tpu_custom_call.1} parent=27 // pred_fallthru
          _
        %s638 = sand.u32 %s89, 1
        %s639 = scalar_lea.sflag [#allocation7], %s638
        %s640 = sand.u32 %s89, 1
        %s641 = smul.addr %s640, 128
        %s642 = scalar_lea.vmem [#allocation8], %s641
        // Predicated region
        $region41: #{tpu_custom_call.1} parent=27 // pred_check
          %p643 = pneg %p99
        $region42: #{tpu_custom_call.1} parent=27 // pred_check_branch
          %645 = sbr.rel (%p643) target = $region44
        $region43: #{tpu_custom_call.1} parent=27 // pred_region
          %s647 = ssub.s32 2048, 2048
          %648 = vsyncadd %s639, %s647
          %s649 = smul.addr %s24, 16
          %s650 = smul.addr %s649, 128
          %s651 = scalar_lea.hbm %s2, %s650
          %s652 = sshll.u32 %s642, 4
          %s653 = int_to_ptr.vmem [resolvable:$true] %s652
          %658 = dma.vmem_to_hbm [thread:$0]  %s653, 2048, %s651, %s639, 256, 256, 16
        $region44: #{tpu_custom_call.1} parent=27 // pred_fallthru
          _
      $region28: #{tpu_custom_call.1} parent=5 // pred_fallthru
        _
      %p659 = scmp.le.s32.totalorder 2, %s15
      // Predicated region
      $region45: #{tpu_custom_call.1} parent=5 // pred_check
        %p660 = pneg %p659
      $region46: #{tpu_custom_call.1} parent=5 // pred_check_branch
        %662 = sbr.rel (%p660) target = $region48
      $region47: #{tpu_custom_call.1} parent=5 // pred_region
        %s663 = ssub.s32 %s15, 2
        // Predicated region
        $region49: #{tpu_custom_call.1} parent=47 // pred_check
          %p664 = pneg %p105
        $region50: #{tpu_custom_call.1} parent=47 // pred_check_branch
          %666 = sbr.rel (%p664) target = $region52
        $region51: #{tpu_custom_call.1} parent=47 // pred_region
          %s667 = sand.u32 %s90, 1
          %s668 = scalar_lea.sflag [#allocation7], %s667
          %s669 = sand.u32 %s90, 1
          %s670 = smul.addr %s669, 128
          %s671 = scalar_lea.vmem [#allocation8], %s670
          %672 = dma.done %s668, 2048
        $region52: #{tpu_custom_call.1} parent=47 // pred_fallthru
          _
      $region48: #{tpu_custom_call.1} parent=5 // pred_fallthru
        _
    $region6: #{tpu_custom_call.1} parent=1 // loop_footer
      %s19 = sadd.s32 1, %s15
    $region7: #{tpu_custom_call.1} parent=1 // loop_footer_branch
      %14 = sbr.rel target = $region3
    $region8: #{tpu_custom_call.1} parent=1 // loop_exit
      _
    %673 = vsyncpa [#allocation6], 1
    %s674 = scalar_lea.sflag [#allocation6], 1
    %675 = vsyncpa %s674, 1
    %676 = vsyncpa [#allocation7], 1
    %s677 = scalar_lea.sflag [#allocation7], 1
    %678 = vsyncpa %s677, 1

</llo_original>
